<compile_context>
chip_gen: v7x
topology: tpu7x:2x2x1
jax: 0.10.0
libtpu: 0.0.40
codegen_flags: <defaults>
</compile_context>

<pallas_src>
import functools
import numpy as np

import jax
import jax.numpy as jnp
from jax.experimental import pallas as pl
from jax.experimental.pallas import tpu as pltpu

# bf16 operands + f32 accumulation for the conv GEMMs; set to jnp.float32 for
# bit-exact f32 semantics end to end.
MATMUL_DTYPE = jnp.bfloat16

_MAX_BATCH_BLOCK = 1024  # batch rows per grid step (per-step VMEM ~ few MiB)
_GRP = 256               # lane-aligned pooling-group width (>= 3*3*16 = 144)
_OUT_LANES = 128         # packed head output width (lane-dense store)


def _on_v5():
    """v5e has no bf16 VPU/EUP -> keep f32 post-matmul intermediates there."""
    try:
        return "v5" in jax.devices()[0].device_kind.lower()
    except Exception:  # pragma: no cover - defensive; default to bf16 path
        return False


# ----------------------------- fused Pallas kernel ---------------------------

def _acmodel_fused_kernel(n_act, pool_dtype,
                          x_ref, w1_ref, b1_ref, w2_ref, b2_ref, w3_ref, b3_ref,
                          wh1_ref, bh1_ref, wh2_ref, bh2_ref, out_ref):
    f32 = jnp.float32
    cd = MATMUL_DTYPE

    # conv1 (2x2, 3->16) + bias + ReLU as one lane-dense GEMM whose 4x256
    # output column groups are organised per 2x2-maxpool tap.  The bf16 cast
    # of the image happens here (VPU pack, hidden under the MXU pass).
    x = x_ref[...].astype(cd)                                        # (Bb, 147)
    a1 = jnp.dot(x, w1_ref[...], preferred_element_type=f32) + b1_ref[...]
    a1 = jnp.maximum(a1, 0.0).astype(pool_dtype)                     # (Bb, 1024)

    # MaxPool2d(2,2): elementwise max over the 4 vreg-aligned tap groups.
    grp = w2_ref.shape[0]                                            # 256
    pooled = a1[:, 0:grp]
    for g in range(1, 4):
        pooled = jnp.maximum(pooled, a1[:, g * grp:(g + 1) * grp])   # (Bb, 256)

    # conv2 (2x2, 16->32) + ReLU as one GEMM over the full 3x3 pooled map.
    a2 = jnp.dot(pooled.astype(cd), w2_ref[...],
                 preferred_element_type=f32) + b2_ref[...]
    a2 = jnp.maximum(a2, 0.0)                                        # (Bb, 128)

    # conv3 (2x2, 32->64) + ReLU: 1x1 output spatial == flatten + GEMM.
    emb = jnp.dot(a2.astype(cd), w3_ref[...],
                  preferred_element_type=f32) + b3_ref[...]
    emb = jnp.maximum(emb, 0.0)                                      # (Bb, 64) f32

    # actor & critic hidden layers packed into a single 128-lane GEMM + tanh.
    # Heads stay f32 (negligible FLOPs, better log-prob fidelity).
    h = jnp.tanh(jnp.dot(emb, wh1_ref[...],
                         preferred_element_type=f32) + bh1_ref[...])  # (Bb, 128)

    # second layers packed block-diagonally into 128 lane-dense output columns:
    # cols [0:n_act] actor logits, col n_act critic value, rest zero.
    o2 = jnp.dot(h, wh2_ref[...],
                 preferred_element_type=f32) + bh2_ref[...]          # (Bb, 128)

    # log_softmax over the actor-logit lanes only (mask padding with -inf),
    # then write one lane-dense (Bb, 128) slab: log-probs | value | zeros.
    lane = jax.lax.broadcasted_iota(jnp.int32, o2.shape, 1)
    is_logit = lane < n_act
    logits = jnp.where(is_logit, o2, -jnp.inf)
    m = jnp.max(logits, axis=1, keepdims=True)
    z = logits - m
    logp = z - jnp.log(jnp.sum(jnp.exp(z), axis=1, keepdims=True))
    out_ref[...] = jnp.where(is_logit, logp, o2)


# --------------------------------- wrapper -----------------------------------

def _round_up(x, m):
    return ((x + m - 1) // m) * m


def acmodel_forward(image_nhwc, memory, params, *, n_act):
    """Returns (log_probs, value, memory).  log_probs are the Categorical
    logits after F.log_softmax; value is the squeezed critic output."""
    B, H, W, C = image_nhwc.shape
    in_feat = H * W * C

    # Flatten NHWC pixels to (B, H*W*C); stays f32 (cast happens in-kernel).
    P = image_nhwc.reshape(B, in_feat)

    # Batch tiling: single block for small B; otherwise >= 2 grid steps so
    # both v7x TensorCores get work, block rows a multiple of 8, capped at
    # _MAX_BATCH_BLOCK to amortize per-step overhead.
    if B <= 16:
        blk, bp = B, B
    else:
        blk = min(_MAX_BATCH_BLOCK, _round_up(pl.cdiv(B, 2), 8))
        bp = _round_up(B, blk)
        if bp != B:
            P = jnp.pad(P, ((0, bp - B), (0, 0)))

    # v5e: no bf16 VPU -> keep the pooled intermediate f32 there.
    pool_dtype = jnp.float32 if _on_v5() else MATMUL_DTYPE

    weight_keys = ("w1", "b1", "w2", "b2", "w3", "b3", "wh1", "bh1", "wh2", "bh2")
    weights = [params[k] for k in weight_keys]

    def _wspec(a):
        return pl.BlockSpec(a.shape, lambda b: (0,) * a.ndim)

    out = pl.pallas_call(
        functools.partial(_acmodel_fused_kernel, n_act, pool_dtype),
        out_shape=jax.ShapeDtypeStruct((bp, _OUT_LANES), jnp.float32),
        grid=(bp // blk,),
        in_specs=[pl.BlockSpec((blk, in_feat), lambda b: (b, 0))]
                 + [_wspec(a) for a in weights],
        out_specs=pl.BlockSpec((blk, _OUT_LANES), lambda b: (b, 0)),
        compiler_params=pltpu.CompilerParams(
            dimension_semantics=("parallel",),
            vmem_limit_bytes=48 << 20),
    )(P, *weights)

    logp = out[:B, :n_act]
    value = out[:B, n_act]
    return logp, value, memory  # memory passes through (no LSTM)


# --------------------------- parameter init / packing ------------------------

def init_acmodel_params(key, n_actions):
    """Raw parameters: conv kernels in (kh, kw, cin, cout), linears in (in, out)."""
    ks = jax.random.split(key, 7)

    def linear(k, fan_in, fan_out):
        # mirrors init_params: N(0,1), per-output-unit L2 normalization, zero bias
        w = jax.random.normal(k, (fan_in, fan_out), jnp.float32)
        w = w / jnp.sqrt(jnp.sum(w * w, axis=0, keepdims=True))
        return w, jnp.zeros((fan_out,), jnp.float32)

    def conv(k, kh, kw, cin, cout):
        # TODO(synk): deterministic stand-in for PyTorch's default Conv2d init.
        w = jax.random.normal(k, (kh, kw, cin, cout), jnp.float32)
        return w / np.sqrt(kh * kw * cin), jnp.zeros((cout,), jnp.float32)

    p = {}
    p["conv1_w"], p["conv1_b"] = conv(ks[0], 2, 2, 3, 16)
    p["conv2_w"], p["conv2_b"] = conv(ks[1], 2, 2, 16, 32)
    p["conv3_w"], p["conv3_b"] = conv(ks[2], 2, 2, 32, 64)
    p["a1_w"], p["a1_b"] = linear(ks[3], 64, 64)
    p["a2_w"], p["a2_b"] = linear(ks[4], 64, n_actions)
    p["c1_w"], p["c1_b"] = linear(ks[5], 64, 64)
    p["c2_w"], p["c2_b"] = linear(ks[6], 64, 1)
    return p


def pack_acmodel_params(p, n_act, matmul_dtype=MATMUL_DTYPE):
    """Fold the conv stack into full-feature-map GEMM weights and pack the
    actor/critic heads into lane-dense weights (one-time, host-side numpy)."""
    f32 = np.float32
    c1w, c1b = np.asarray(p["conv1_w"], f32), np.asarray(p["conv1_b"], f32)
    c2w, c2b = np.asarray(p["conv2_w"], f32), np.asarray(p["conv2_b"], f32)
    c3w, c3b = np.asarray(p["conv3_w"], f32), np.asarray(p["conv3_b"], f32)
    wa1, ba1 = np.asarray(p["a1_w"], f32), np.asarray(p["a1_b"], f32)
    wa2, ba2 = np.asarray(p["a2_w"], f32), np.asarray(p["a2_b"], f32)
    wc1, bc1 = np.asarray(p["c1_w"], f32), np.asarray(p["c1_b"], f32)
    wc2, bc2 = np.asarray(p["c2_w"], f32), np.asarray(p["c2_b"], f32)

    # conv1: (B, 7*7*3) -> (B, 4*256).  Output lane g*256 + (oh*3+ow)*16 + co
    # holds conv1_out at spatial (2*oh + dy, 2*ow + dx) with g = dy*2 + dx,
    # so the 2x2 maxpool is max over the 4 groups g.
    w1p = np.zeros((7 * 7 * 3, 4 * _GRP), f32)
    b1p = np.zeros((1, 4 * _GRP), f32)
    for y in range(6):
        for x in range(6):
            g = (y % 2) * 2 + (x % 2)
            col = g * _GRP + ((y // 2) * 3 + (x // 2)) * 16
            b1p[0, col:col + 16] = c1b
            for dy in range(2):
                for dx in range(2):
                    row = ((y + dy) * 7 + (x + dx)) * 3
                    w1p[row:row + 3, col:col + 16] = c1w[dy, dx]

    # conv2: pooled (B, 256) [lane (oh*3+ow)*16+ci, rows >=144 are zero-pad]
    #        -> (B, 128) [lane (i*2+j)*32 + co]
    w2p = np.zeros((_GRP, 128), f32)
    b2p = np.zeros((1, 128), f32)
    for i in range(2):
        for j in range(2):
            col = (i * 2 + j) * 32
            b2p[0, col:col + 32] = c2b
            for dy in range(2):
                for dx in range(2):
                    row = ((i + dy) * 3 + (j + dx)) * 16
                    w2p[row:row + 16, col:col + 32] = c2w[dy, dx]

    # conv3: receptive field is the whole 2x2 map -> plain im2col GEMM weight.
    w3p = c3w.reshape(2 * 2 * 32, 64)
    b3p = c3b.reshape(1, 64)

    # heads, layer 1: [actor | critic] packed to a single 128-lane weight (f32).
    wh1 = np.concatenate([wa1, wc1], axis=1)               # (64, 128)
    bh1 = np.concatenate([ba1, bc1])[None, :]              # (1, 128)
    # heads, layer 2: block-diagonal pack, padded to 128 lane-dense output cols:
    # cols [0:n_act] logits, col n_act value, cols n_act+1..127 zero.
    wh2 = np.zeros((128, _OUT_LANES), f32)
    wh2[:64, :n_act] = wa2
    wh2[64:, n_act] = wc2[:, 0]
    bh2 = np.zeros((1, _OUT_LANES), f32)
    bh2[0, :n_act] = ba2
    bh2[0, n_act] = bc2[0]

    jd = lambda a: jnp.asarray(a, matmul_dtype)            # conv GEMM operands
    jf = lambda a: jnp.asarray(a, jnp.float32)             # biases + head weights
    return {"w1": jd(w1p), "b1": jf(b1p), "w2": jd(w2p), "b2": jf(b2p),
            "w3": jd(w3p), "b3": jf(b3p), "wh1": jf(wh1), "bh1": jf(bh1),
            "wh2": jf(wh2), "bh2": jf(bh2)}


# ------------------------- pure-JAX reference (checking) ---------------------

def _reference_forward(image, p, n_act):
    """Plain-JAX NHWC re-statement of the PyTorch forward, for validation."""
    def conv2x2_relu(x, w, b):
        B, H, W, C = x.shape
        cout = w.shape[-1]
        pat = jnp.concatenate([x[:, dy:H - 1 + dy, dx:W - 1 + dx, :]
                               for dy in (0, 1) for dx in (0, 1)], axis=-1)
        y = pat.reshape(-1, 4 * C) @ w.reshape(4 * C, cout) + b
        return jnp.maximum(y, 0.0).reshape(B, H - 1, W - 1, cout)

    x = conv2x2_relu(image, p["conv1_w"], p["conv1_b"])
    B, H, W, C = x.shape
    x = jnp.max(x.reshape(B, H // 2, 2, W // 2, 2, C), axis=(2, 4))  # maxpool 2x2
    x = conv2x2_relu(x, p["conv2_w"], p["conv2_b"])
    x = conv2x2_relu(x, p["conv3_w"], p["conv3_b"])
    emb = x.reshape(B, -1)       # 1x1 spatial -> matches NCHW flatten order
    ha = jnp.tanh(emb @ p["a1_w"] + p["a1_b"])
    logp = jax.nn.log_softmax(ha @ p["a2_w"] + p["a2_b"], axis=1)
    hc = jnp.tanh(emb @ p["c1_w"] + p["c1_b"])
    value = (hc @ p["c2_w"] + p["c2_b"])[:, 0]
    return logp, value


# ----------------------------------- main -------------------------------------

if __name__ == "__main__":
    key = jax.random.PRNGKey(0)
    k_img, k_params = jax.random.split(key)

    B, N, M = 2, 7, 7                   # MiniGrid 7x7x3 observation
    n_actions = 7
    image_embedding_size = ((N - 1) // 2 - 2) * ((M - 1) // 2 - 2) * 64  # = 64

    image = jax.random.uniform(k_img, (B, N, M, 3), dtype=jnp.float32)  # NHWC
    memory = jnp.zeros((B, 2 * image_embedding_size), jnp.float32)

    raw_params = init_acmodel_params(k_params, n_actions)
    packed_params = pack_acmodel_params(raw_params, n_actions)

    fwd = jax.jit(functools.partial(acmodel_forward, n_act=n_actions))
    logp, value, mem_out = fwd(image, memory, packed_params)
    jax.block_until_ready((logp, value, mem_out))

    assert logp.shape == (B, n_actions)
    assert value.shape == (B,)
    assert mem_out.shape == memory.shape
    # Categorical logits are log-probs: each row must exponentiate-sum to 1.
    assert bool(jnp.allclose(jnp.sum(jnp.exp(logp), axis=1), 1.0, atol=1e-4))

    # Validate conv-folding / head-packing against a plain-JAX reference
    # (loose tolerance covers bf16 conv-GEMM operands).
    ref_logp, ref_value = _reference_forward(image, raw_params, n_actions)
    assert bool(jnp.allclose(logp, ref_logp, atol=1e-1, rtol=1e-1))
    assert bool(jnp.allclose(value, ref_value, atol=1e-1, rtol=1e-1))

    print("KERNEL_OK")
</pallas_src>

<mosaic_0001>
module attributes {stable_mosaic.version = 11 : i64} {
  func.func @_acmodel_fused_kernel(%arg0: i32, %arg1: memref<2x147xf32, #tpu.memory_space<vmem>>, %arg2: memref<147x1024xbf16, #tpu.memory_space<vmem>>, %arg3: memref<1x1024xf32, #tpu.memory_space<vmem>>, %arg4: memref<256x128xbf16, #tpu.memory_space<vmem>>, %arg5: memref<1x128xf32, #tpu.memory_space<vmem>>, %arg6: memref<128x64xbf16, #tpu.memory_space<vmem>>, %arg7: memref<1x64xf32, #tpu.memory_space<vmem>>, %arg8: memref<64x128xf32, #tpu.memory_space<vmem>>, %arg9: memref<1x128xf32, #tpu.memory_space<vmem>>, %arg10: memref<128x128xf32, #tpu.memory_space<vmem>>, %arg11: memref<1x128xf32, #tpu.memory_space<vmem>>, %arg12: memref<2x128xf32, #tpu.memory_space<vmem>>) attributes {dimension_semantics = [#tpu.dimension_semantics<parallel>], iteration_bounds = array<i64: 1>, scalar_prefetch = 0 : i64, scratch_operands = 0 : i64, tpu.core_type = #tpu.core_type<tc>, window_params = [{transform_indices = @transform_0, window_bounds = array<i64: 2, 147>}, {pipeline_mode = #tpu.pipeline_mode<synchronous>, transform_indices = @transform_1, window_bounds = array<i64: 147, 1024>}, {pipeline_mode = #tpu.pipeline_mode<synchronous>, transform_indices = @transform_2, window_bounds = array<i64: 1, 1024>}, {pipeline_mode = #tpu.pipeline_mode<synchronous>, transform_indices = @transform_3, window_bounds = array<i64: 256, 128>}, {pipeline_mode = #tpu.pipeline_mode<synchronous>, transform_indices = @transform_4, window_bounds = array<i64: 1, 128>}, {pipeline_mode = #tpu.pipeline_mode<synchronous>, transform_indices = @transform_5, window_bounds = array<i64: 128, 64>}, {pipeline_mode = #tpu.pipeline_mode<synchronous>, transform_indices = @transform_6, window_bounds = array<i64: 1, 64>}, {pipeline_mode = #tpu.pipeline_mode<synchronous>, transform_indices = @transform_7, window_bounds = array<i64: 64, 128>}, {pipeline_mode = #tpu.pipeline_mode<synchronous>, transform_indices = @transform_8, window_bounds = array<i64: 1, 128>}, {pipeline_mode = #tpu.pipeline_mode<synchronous>, transform_indices = @transform_9, window_bounds = array<i64: 128, 128>}, {pipeline_mode = #tpu.pipeline_mode<synchronous>, transform_indices = @transform_10, window_bounds = array<i64: 1, 128>}, {transform_indices = @transform_11, window_bounds = array<i64: 2, 128>}]} {
    %c0 = arith.constant 0 : index
    %c0_0 = arith.constant 0 : index
    %0 = vector.load %arg1[%c0, %c0_0] : memref<2x147xf32, #tpu.memory_space<vmem>>, vector<2x147xf32>
    %1 = arith.truncf %0 : vector<2x147xf32> to vector<2x147xbf16>
    %c0_1 = arith.constant 0 : index
    %c0_2 = arith.constant 0 : index
    %2 = vector.load %arg2[%c0_1, %c0_2] : memref<147x1024xbf16, #tpu.memory_space<vmem>>, vector<147x1024xbf16>
    %cst = arith.constant dense<0.000000e+00> : vector<2x1024xf32>
    %3 = tpu.matmul %1, %2, %cst {dimension_numbers = #tpu.dot_dimension_numbers<[1], [0], [0], [1], [0, 0, 1, 1], [], []>} : vector<2x147xbf16>, vector<147x1024xbf16>, vector<2x1024xf32> -> vector<2x1024xf32>
    %c0_3 = arith.constant 0 : index
    %c0_4 = arith.constant 0 : index
    %4 = vector.load %arg3[%c0_3, %c0_4] : memref<1x1024xf32, #tpu.memory_space<vmem>>, vector<1x1024xf32>
    %5 = vector.broadcast %4 : vector<1x1024xf32> to vector<2x1024xf32>
    %6 = arith.addf %3, %5 : vector<2x1024xf32>
    %cst_5 = arith.constant 0.000000e+00 : f32
    %7 = vector.broadcast %cst_5 : f32 to vector<2x1024xf32>
    %8 = arith.maximumf %6, %7 : vector<2x1024xf32>
    %9 = arith.truncf %8 : vector<2x1024xf32> to vector<2x1024xbf16>
    %10 = vector.extract_strided_slice %9 {offsets = [0, 0], sizes = [2, 256], strides = [1, 1]} : vector<2x1024xbf16> to vector<2x256xbf16>
    %11 = vector.extract_strided_slice %9 {offsets = [0, 256], sizes = [2, 256], strides = [1, 1]} : vector<2x1024xbf16> to vector<2x256xbf16>
    %12 = arith.maximumf %10, %11 : vector<2x256xbf16>
    %13 = vector.extract_strided_slice %9 {offsets = [0, 512], sizes = [2, 256], strides = [1, 1]} : vector<2x1024xbf16> to vector<2x256xbf16>
    %14 = arith.maximumf %12, %13 : vector<2x256xbf16>
    %15 = vector.extract_strided_slice %9 {offsets = [0, 768], sizes = [2, 256], strides = [1, 1]} : vector<2x1024xbf16> to vector<2x256xbf16>
    %16 = arith.maximumf %14, %15 : vector<2x256xbf16>
    %c0_6 = arith.constant 0 : index
    %c0_7 = arith.constant 0 : index
    %17 = vector.load %arg4[%c0_6, %c0_7] : memref<256x128xbf16, #tpu.memory_space<vmem>>, vector<256x128xbf16>
    %cst_8 = arith.constant dense<0.000000e+00> : vector<2x128xf32>
    %18 = tpu.matmul %16, %17, %cst_8 {dimension_numbers = #tpu.dot_dimension_numbers<[1], [0], [0], [1], [0, 0, 1, 1], [], []>} : vector<2x256xbf16>, vector<256x128xbf16>, vector<2x128xf32> -> vector<2x128xf32>
    %c0_9 = arith.constant 0 : index
    %c0_10 = arith.constant 0 : index
    %19 = vector.load %arg5[%c0_9, %c0_10] : memref<1x128xf32, #tpu.memory_space<vmem>>, vector<1x128xf32>
    %20 = vector.broadcast %19 : vector<1x128xf32> to vector<2x128xf32>
    %21 = arith.addf %18, %20 : vector<2x128xf32>
    %cst_11 = arith.constant 0.000000e+00 : f32
    %22 = vector.broadcast %cst_11 : f32 to vector<2x128xf32>
    %23 = arith.maximumf %21, %22 : vector<2x128xf32>
    %24 = arith.truncf %23 : vector<2x128xf32> to vector<2x128xbf16>
    %c0_12 = arith.constant 0 : index
    %c0_13 = arith.constant 0 : index
    %25 = vector.load %arg6[%c0_12, %c0_13] : memref<128x64xbf16, #tpu.memory_space<vmem>>, vector<128x64xbf16>
    %cst_14 = arith.constant dense<0.000000e+00> : vector<2x64xf32>
    %26 = tpu.matmul %24, %25, %cst_14 {dimension_numbers = #tpu.dot_dimension_numbers<[1], [0], [0], [1], [0, 0, 1, 1], [], []>} : vector<2x128xbf16>, vector<128x64xbf16>, vector<2x64xf32> -> vector<2x64xf32>
    %c0_15 = arith.constant 0 : index
    %c0_16 = arith.constant 0 : index
    %27 = vector.load %arg7[%c0_15, %c0_16] : memref<1x64xf32, #tpu.memory_space<vmem>>, vector<1x64xf32>
    %28 = vector.broadcast %27 : vector<1x64xf32> to vector<2x64xf32>
    %29 = arith.addf %26, %28 : vector<2x64xf32>
    %cst_17 = arith.constant 0.000000e+00 : f32
    %30 = vector.broadcast %cst_17 : f32 to vector<2x64xf32>
    %31 = arith.maximumf %29, %30 : vector<2x64xf32>
    %c0_18 = arith.constant 0 : index
    %c0_19 = arith.constant 0 : index
    %32 = vector.load %arg8[%c0_18, %c0_19] : memref<64x128xf32, #tpu.memory_space<vmem>>, vector<64x128xf32>
    %cst_20 = arith.constant dense<0.000000e+00> : vector<2x128xf32>
    %33 = tpu.matmul %31, %32, %cst_20 {dimension_numbers = #tpu.dot_dimension_numbers<[1], [0], [0], [1], [0, 0, 1, 1], [], []>} : vector<2x64xf32>, vector<64x128xf32>, vector<2x128xf32> -> vector<2x128xf32>
    %c0_21 = arith.constant 0 : index
    %c0_22 = arith.constant 0 : index
    %34 = vector.load %arg9[%c0_21, %c0_22] : memref<1x128xf32, #tpu.memory_space<vmem>>, vector<1x128xf32>
    %35 = vector.broadcast %34 : vector<1x128xf32> to vector<2x128xf32>
    %36 = arith.addf %33, %35 : vector<2x128xf32>
    %37 = math.tanh %36 : vector<2x128xf32>
    %c0_23 = arith.constant 0 : index
    %c0_24 = arith.constant 0 : index
    %38 = vector.load %arg10[%c0_23, %c0_24] : memref<128x128xf32, #tpu.memory_space<vmem>>, vector<128x128xf32>
    %cst_25 = arith.constant dense<0.000000e+00> : vector<2x128xf32>
    %39 = tpu.matmul %37, %38, %cst_25 {dimension_numbers = #tpu.dot_dimension_numbers<[1], [0], [0], [1], [0, 0, 1, 1], [], []>} : vector<2x128xf32>, vector<128x128xf32>, vector<2x128xf32> -> vector<2x128xf32>
    %c0_26 = arith.constant 0 : index
    %c0_27 = arith.constant 0 : index
    %40 = vector.load %arg11[%c0_26, %c0_27] : memref<1x128xf32, #tpu.memory_space<vmem>>, vector<1x128xf32>
    %41 = vector.broadcast %40 : vector<1x128xf32> to vector<2x128xf32>
    %42 = arith.addf %39, %41 : vector<2x128xf32>
    %43 = tpu.iota {dimensions = array<i32: 1>} : vector<2x128xi32>
    %c7_i32 = arith.constant 7 : i32
    %44 = vector.broadcast %c7_i32 : i32 to vector<2x128xi32>
    %45 = arith.cmpi slt, %43, %44 : vector<2x128xi32>
    %cst_28 = arith.constant 0xFF800000 : f32
    %46 = vector.broadcast %cst_28 : f32 to vector<2x128xf32>
    %47 = arith.select %45, %42, %46 : vector<2x128xi1>, vector<2x128xf32>
    %cst_29 = arith.constant dense<0xFF800000> : vector<2xf32>
    %48 = vector.multi_reduction <maximumf>, %47, %cst_29 [1] : vector<2x128xf32> to vector<2xf32>
    %49 = vector.shape_cast %48 : vector<2xf32> to vector<2x1xf32>
    %50 = vector.broadcast %49 : vector<2x1xf32> to vector<2x128xf32>
    %51 = arith.subf %47, %50 : vector<2x128xf32>
    %52 = math.exp %51 : vector<2x128xf32>
    %cst_30 = arith.constant dense<0.000000e+00> : vector<2xf32>
    %53 = vector.multi_reduction <add>, %52, %cst_30 [1] : vector<2x128xf32> to vector<2xf32>
    %54 = vector.shape_cast %53 : vector<2xf32> to vector<2x1xf32>
    %55 = math.log %54 : vector<2x1xf32>
    %56 = vector.broadcast %55 : vector<2x1xf32> to vector<2x128xf32>
    %57 = arith.subf %51, %56 : vector<2x128xf32>
    %58 = arith.select %45, %57, %42 : vector<2x128xi1>, vector<2x128xf32>
    %c0_31 = arith.constant 0 : index
    %c0_32 = arith.constant 0 : index
    %59 = vector.load %arg12[%c0_31, %c0_32] : memref<2x128xf32, #tpu.memory_space<vmem>>, vector<2x128xf32>
    tpu.vector_store %arg12[%c0_31, %c0_32], %58 {strides = array<i32>} : memref<2x128xf32, #tpu.memory_space<vmem>>, vector<2x128xf32>,
    return
  }
  func.func @transform_0(%arg0: i32) -> (i32, i32) {
    %c0_i32 = arith.constant 0 : i32
    %c0_i32_0 = arith.constant 0 : i32
    return %arg0, %c0_i32 : i32, i32
  }
  func.func @transform_1(%arg0: i32) -> (i32, i32) {
    %c0_i32 = arith.constant 0 : i32
    %c0_i32_0 = arith.constant 0 : i32
    %c0_i32_1 = arith.constant 0 : i32
    return %c0_i32, %c0_i32_0 : i32, i32
  }
  func.func @transform_2(%arg0: i32) -> (i32, i32) {
    %c0_i32 = arith.constant 0 : i32
    %c0_i32_0 = arith.constant 0 : i32
    %c0_i32_1 = arith.constant 0 : i32
    return %c0_i32, %c0_i32_0 : i32, i32
  }
  func.func @transform_3(%arg0: i32) -> (i32, i32) {
    %c0_i32 = arith.constant 0 : i32
    %c0_i32_0 = arith.constant 0 : i32
    %c0_i32_1 = arith.constant 0 : i32
    return %c0_i32, %c0_i32_0 : i32, i32
  }
  func.func @transform_4(%arg0: i32) -> (i32, i32) {
    %c0_i32 = arith.constant 0 : i32
    %c0_i32_0 = arith.constant 0 : i32
    %c0_i32_1 = arith.constant 0 : i32
    return %c0_i32, %c0_i32_0 : i32, i32
  }
  func.func @transform_5(%arg0: i32) -> (i32, i32) {
    %c0_i32 = arith.constant 0 : i32
    %c0_i32_0 = arith.constant 0 : i32
    %c0_i32_1 = arith.constant 0 : i32
    return %c0_i32, %c0_i32_0 : i32, i32
  }
  func.func @transform_6(%arg0: i32) -> (i32, i32) {
    %c0_i32 = arith.constant 0 : i32
    %c0_i32_0 = arith.constant 0 : i32
    %c0_i32_1 = arith.constant 0 : i32
    return %c0_i32, %c0_i32_0 : i32, i32
  }
  func.func @transform_7(%arg0: i32) -> (i32, i32) {
    %c0_i32 = arith.constant 0 : i32
    %c0_i32_0 = arith.constant 0 : i32
    %c0_i32_1 = arith.constant 0 : i32
    return %c0_i32, %c0_i32_0 : i32, i32
  }
  func.func @transform_8(%arg0: i32) -> (i32, i32) {
    %c0_i32 = arith.constant 0 : i32
    %c0_i32_0 = arith.constant 0 : i32
    %c0_i32_1 = arith.constant 0 : i32
    return %c0_i32, %c0_i32_0 : i32, i32
  }
  func.func @transform_9(%arg0: i32) -> (i32, i32) {
    %c0_i32 = arith.constant 0 : i32
    %c0_i32_0 = arith.constant 0 : i32
    %c0_i32_1 = arith.constant 0 : i32
    return %c0_i32, %c0_i32_0 : i32, i32
  }
  func.func @transform_10(%arg0: i32) -> (i32, i32) {
    %c0_i32 = arith.constant 0 : i32
    %c0_i32_0 = arith.constant 0 : i32
    %c0_i32_1 = arith.constant 0 : i32
    return %c0_i32, %c0_i32_0 : i32, i32
  }
  func.func @transform_11(%arg0: i32) -> (i32, i32) {
    %c0_i32 = arith.constant 0 : i32
    %c0_i32_0 = arith.constant 0 : i32
    return %arg0, %c0_i32 : i32, i32
  }
}

</mosaic_0001>

<llo_original>
// kernel: acmodel_forward.1
$region0: #{acmodel_forward.1}
  #allocation0 [shape = 'u32[]', space=smem, size = 0x4, offset = 0x4, fixed_abs, tag = 'smem constant byte address 0x4 - core index']
  #allocation1 [shape = 'u32[144,128]{1,0:T(1,128)}', space=vmem, size = 0x12000, scoped, tag = 'internal scratch']
  %s0 = inlined_call_operand.vmem [shape: f32[2,147], index: 0, kind: input, shape index: {}]
  %s1 = inlined_call_operand.hbm [shape: bf16[147,1024], index: 1, kind: input, shape index: {}]
  %s2 = inlined_call_operand.vmem [shape: f32[1,1024], index: 2, kind: input, shape index: {}]
  %s3 = inlined_call_operand.vmem [shape: bf16[256,128], index: 3, kind: input, shape index: {}]
  %s4 = inlined_call_operand.vmem [shape: f32[1,128], index: 4, kind: input, shape index: {}]
  %s5 = inlined_call_operand.vmem [shape: bf16[128,64], index: 5, kind: input, shape index: {}]
  %s6 = inlined_call_operand.vmem [shape: f32[1,64], index: 6, kind: input, shape index: {}]
  %s7 = inlined_call_operand.vmem [shape: f32[64,128], index: 7, kind: input, shape index: {}]
  %s8 = inlined_call_operand.vmem [shape: f32[1,128], index: 8, kind: input, shape index: {}]
  %s9 = inlined_call_operand.vmem [shape: f32[128,128], index: 9, kind: input, shape index: {}]
  %s10 = inlined_call_operand.vmem [shape: f32[1,128], index: 10, kind: input, shape index: {}]
  %s11 = inlined_call_operand.vmem [shape: f32[2,128], index: 11, kind: output, shape index: {}]
  %s12 = sld [smem:[#allocation0]]
  $region58: #{acmodel_forward.1} parent=0
    _
  %s14 = ssub.s32 1, %s12
  %s15 = scalar_select 0, %s14, %s12
  $region1: #{acmodel_forward.1} parent=0
    #allocation2 [shape = 'u8[311296]{0}', space=vmem, size = 0x4c000, scoped, tag = 'input window, operand 1, single buffered']
    #allocation3 [shape = 's32[1]{0}', space=sflag, size = 0x4, scoped, tag = 'scoped memory for acmodel_forward.1']
    %16 = vsyncpa [#allocation3], 0
    // Predicated region
    $region2: #{acmodel_forward.1} parent=1 // pred_check
      _
    $region3: #{acmodel_forward.1} parent=1 // pred_check_branch
      %18 = sbr.rel (0) target = $region5
    $region4: #{acmodel_forward.1} parent=1 // pred_region
      _
    $region5: #{acmodel_forward.1} parent=1 // pred_fallthru
      _
    // Predicated region
    $region6: #{acmodel_forward.1} parent=1 // pred_check
      _
    $region7: #{acmodel_forward.1} parent=1 // pred_check_branch
      %20 = sbr.rel (0) target = $region9
    $region8: #{acmodel_forward.1} parent=1 // pred_region
      %s22 = ssub.s32 9728, 9728
      %23 = vsyncadd [#allocation3], %s22
      %s24 = sshll.u32 [#allocation2], 4
      %s25 = int_to_ptr.vmem [resolvable:$true] %s24
      %30 = dma.hbm_to_vmem [thread:$0]  %s1, 9728, %s25, [#allocation3], 512, 512, 32
    $region9: #{acmodel_forward.1} parent=1 // pred_fallthru
      _
    // Predicated region
    $region10: #{acmodel_forward.1} parent=1 // pred_check
      _
    $region11: #{acmodel_forward.1} parent=1 // pred_check_branch
      %32 = sbr.rel (0) target = $region13
    $region12: #{acmodel_forward.1} parent=1 // pred_region
      _
    $region13: #{acmodel_forward.1} parent=1 // pred_fallthru
      _
    // Predicated region
    $region14: #{acmodel_forward.1} parent=1 // pred_check
      _
    $region15: #{acmodel_forward.1} parent=1 // pred_check_branch
      %34 = sbr.rel (0) target = $region17
    $region16: #{acmodel_forward.1} parent=1 // pred_region
      _
    $region17: #{acmodel_forward.1} parent=1 // pred_fallthru
      _
    // Predicated region
    $region18: #{acmodel_forward.1} parent=1 // pred_check
      _
    $region19: #{acmodel_forward.1} parent=1 // pred_check_branch
      %36 = sbr.rel (0) target = $region21
    $region20: #{acmodel_forward.1} parent=1 // pred_region
      _
    $region21: #{acmodel_forward.1} parent=1 // pred_fallthru
      _
    // Predicated region
    $region22: #{acmodel_forward.1} parent=1 // pred_check
      _
    $region23: #{acmodel_forward.1} parent=1 // pred_check_branch
      %38 = sbr.rel (0) target = $region25
    $region24: #{acmodel_forward.1} parent=1 // pred_region
      _
    $region25: #{acmodel_forward.1} parent=1 // pred_fallthru
      _
    // Predicated region
    $region26: #{acmodel_forward.1} parent=1 // pred_check
      _
    $region27: #{acmodel_forward.1} parent=1 // pred_check_branch
      %40 = sbr.rel (0) target = $region29
    $region28: #{acmodel_forward.1} parent=1 // pred_region
      _
    $region29: #{acmodel_forward.1} parent=1 // pred_fallthru
      _
    // Predicated region
    $region30: #{acmodel_forward.1} parent=1 // pred_check
      _
    $region31: #{acmodel_forward.1} parent=1 // pred_check_branch
      %42 = sbr.rel (0) target = $region33
    $region32: #{acmodel_forward.1} parent=1 // pred_region
      _
    $region33: #{acmodel_forward.1} parent=1 // pred_fallthru
      _
    // Predicated region
    $region34: #{acmodel_forward.1} parent=1 // pred_check
      _
    $region35: #{acmodel_forward.1} parent=1 // pred_check_branch
      %44 = sbr.rel (0) target = $region37
    $region36: #{acmodel_forward.1} parent=1 // pred_region
      _
    $region37: #{acmodel_forward.1} parent=1 // pred_fallthru
      _
    // Predicated region
    $region38: #{acmodel_forward.1} parent=1 // pred_check
      _
    $region39: #{acmodel_forward.1} parent=1 // pred_check_branch
      %46 = sbr.rel (0) target = $region41
    $region40: #{acmodel_forward.1} parent=1 // pred_region
      _
    $region41: #{acmodel_forward.1} parent=1 // pred_fallthru
      _
    // Predicated region
    $region42: #{acmodel_forward.1} parent=1 // pred_check
      _
    $region43: #{acmodel_forward.1} parent=1 // pred_check_branch
      %48 = sbr.rel (0) target = $region45
    $region44: #{acmodel_forward.1} parent=1 // pred_region
      _
    $region45: #{acmodel_forward.1} parent=1 // pred_fallthru
      _
    // Predicated region
    $region46: #{acmodel_forward.1} parent=1 // pred_check
      _
    $region47: #{acmodel_forward.1} parent=1 // pred_check_branch
      %50 = sbr.rel (0) target = $region49
    $region48: #{acmodel_forward.1} parent=1 // pred_region
      %51 = dma.done [#allocation3], 9728
    $region49: #{acmodel_forward.1} parent=1 // pred_fallthru
      _
    %v53 = vld [vmem:[%s0] sm:$0xf]
    %v56 = vunpack.c.l.s4 1983009808
    %v57 = vunpack.c.0.s8 %v56
    %v58 = vlaneseq
    %v59 = vshrl.u32 %v58, 7
    %v60 = vsub.s32 %v57, %v59
    %v61 = vrot.slane %v53, %v60
    %v62 = vcombine.high %v61, %v61
    %v65 = vpack.c.bf16 %v61, %v61
    %v66 = vpack.c.bf16 %v62, %v62
    %v67 = vld [vmem:[#allocation2] sm:$0xff]
    %v68 = vld [vmem:[#allocation2 + $0x8] sm:$0xff]
    %v69 = vld [vmem:[#allocation2 + $0x10] sm:$0xff]
    %v70 = vld [vmem:[#allocation2 + $0x18] sm:$0xff]
    %v71 = vld [vmem:[#allocation2 + $0x20] sm:$0xff]
    %v72 = vld [vmem:[#allocation2 + $0x28] sm:$0xff]
    %v73 = vld [vmem:[#allocation2 + $0x30] sm:$0xff]
    %v74 = vld [vmem:[#allocation2 + $0x38] sm:$0xff]
    %v75 = vld [vmem:[#allocation2 + $0x40] sm:$0xff]
    %v76 = vld [vmem:[#allocation2 + $0x48] sm:$0xff]
    %v77 = vld [vmem:[#allocation2 + $0x50] sm:$0xff]
    %v78 = vld [vmem:[#allocation2 + $0x58] sm:$0xff]
    %v79 = vld [vmem:[#allocation2 + $0x60] sm:$0xff]
    %v80 = vld [vmem:[#allocation2 + $0x68] sm:$0xff]
    %v81 = vld [vmem:[#allocation2 + $0x70] sm:$0xff]
    %v82 = vld [vmem:[#allocation2 + $0x78] sm:$0xff]
    %v83 = vld [vmem:[#allocation2 + $0x80] sm:$0xff]
    %v84 = vld [vmem:[#allocation2 + $0x88] sm:$0xff]
    %v85 = vld [vmem:[#allocation2 + $0x90] sm:$0xff]
    %v86 = vld [vmem:[#allocation2 + $0x98] sm:$0xff]
    %v87 = vld [vmem:[#allocation2 + $0xa0] sm:$0xff]
    %v88 = vld [vmem:[#allocation2 + $0xa8] sm:$0xff]
    %v89 = vld [vmem:[#allocation2 + $0xb0] sm:$0xff]
    %v90 = vld [vmem:[#allocation2 + $0xb8] sm:$0xff]
    %v91 = vld [vmem:[#allocation2 + $0xc0] sm:$0xff]
    %v92 = vld [vmem:[#allocation2 + $0xc8] sm:$0xff]
    %v93 = vld [vmem:[#allocation2 + $0xd0] sm:$0xff]
    %v94 = vld [vmem:[#allocation2 + $0xd8] sm:$0xff]
    %v95 = vld [vmem:[#allocation2 + $0xe0] sm:$0xff]
    %v96 = vld [vmem:[#allocation2 + $0xe8] sm:$0xff]
    %v97 = vld [vmem:[#allocation2 + $0xf0] sm:$0xff]
    %v98 = vld [vmem:[#allocation2 + $0xf8] sm:$0xff]
    %v99 = vld [vmem:[#allocation2 + $0x100] sm:$0xff]
    %v100 = vld [vmem:[#allocation2 + $0x108] sm:$0xff]
    %v101 = vld [vmem:[#allocation2 + $0x110] sm:$0xff]
    %v102 = vld [vmem:[#allocation2 + $0x118] sm:$0xff]
    %v103 = vld [vmem:[#allocation2 + $0x120] sm:$0xff]
    %v104 = vld [vmem:[#allocation2 + $0x128] sm:$0xff]
    %v105 = vld [vmem:[#allocation2 + $0x130] sm:$0xff]
    %v106 = vld [vmem:[#allocation2 + $0x138] sm:$0xff]
    %v107 = vld [vmem:[#allocation2 + $0x140] sm:$0xff]
    %v108 = vld [vmem:[#allocation2 + $0x148] sm:$0xff]
    %v109 = vld [vmem:[#allocation2 + $0x150] sm:$0xff]
    %v110 = vld [vmem:[#allocation2 + $0x158] sm:$0xff]
    %v111 = vld [vmem:[#allocation2 + $0x160] sm:$0xff]
    %v112 = vld [vmem:[#allocation2 + $0x168] sm:$0xff]
    %v113 = vld [vmem:[#allocation2 + $0x170] sm:$0xff]
    %v114 = vld [vmem:[#allocation2 + $0x178] sm:$0xff]
    %v115 = vld [vmem:[#allocation2 + $0x180] sm:$0xff]
    %v116 = vld [vmem:[#allocation2 + $0x188] sm:$0xff]
    %v117 = vld [vmem:[#allocation2 + $0x190] sm:$0xff]
    %v118 = vld [vmem:[#allocation2 + $0x198] sm:$0xff]
    %v119 = vld [vmem:[#allocation2 + $0x1a0] sm:$0xff]
    %v120 = vld [vmem:[#allocation2 + $0x1a8] sm:$0xff]
    %v121 = vld [vmem:[#allocation2 + $0x1b0] sm:$0xff]
    %v122 = vld [vmem:[#allocation2 + $0x1b8] sm:$0xff]
    %v123 = vld [vmem:[#allocation2 + $0x1c0] sm:$0xff]
    %v124 = vld [vmem:[#allocation2 + $0x1c8] sm:$0xff]
    %v125 = vld [vmem:[#allocation2 + $0x1d0] sm:$0xff]
    %v126 = vld [vmem:[#allocation2 + $0x1d8] sm:$0xff]
    %v127 = vld [vmem:[#allocation2 + $0x1e0] sm:$0xff]
    %v128 = vld [vmem:[#allocation2 + $0x1e8] sm:$0xff]
    %v129 = vld [vmem:[#allocation2 + $0x1f0] sm:$0xff]
    %v130 = vld [vmem:[#allocation2 + $0x1f8] sm:$0xff]
    %v131 = vld [vmem:[#allocation2 + $0x200] sm:$0xff]
    %v132 = vld [vmem:[#allocation2 + $0x208] sm:$0xff]
    %v133 = vld [vmem:[#allocation2 + $0x210] sm:$0xff]
    %v134 = vld [vmem:[#allocation2 + $0x218] sm:$0xff]
    %v135 = vld [vmem:[#allocation2 + $0x220] sm:$0xff]
    %v136 = vld [vmem:[#allocation2 + $0x228] sm:$0xff]
    %v137 = vld [vmem:[#allocation2 + $0x230] sm:$0xff]
    %v138 = vld [vmem:[#allocation2 + $0x238] sm:$0xff]
    %v139 = vld [vmem:[#allocation2 + $0x240] sm:$0x33]
    %v140 = vld [vmem:[#allocation2 + $0x248] sm:$0x33]
    %v141 = vld [vmem:[#allocation2 + $0x250] sm:$0x33]
    %v142 = vld [vmem:[#allocation2 + $0x258] sm:$0x33]
    %v143 = vld [vmem:[%s2] sm:$0xff]
    %v145 = vlaneseq
    %v146 = vshrl.u32 %v145, 7
    %v147 = vsub.s32 0, %v146
    %v148 = vrot.slane %v143, %v147
    %v149 = vlaneseq
    %v150 = vshrl.u32 %v149, 7
    %v151 = vsub.s32 1, %v150
    %v152 = vrot.slane %v143, %v151
    %v153 = vlaneseq
    %v154 = vshrl.u32 %v153, 7
    %v155 = vsub.s32 2, %v154
    %v156 = vrot.slane %v143, %v155
    %v157 = vlaneseq
    %v158 = vshrl.u32 %v157, 7
    %v159 = vsub.s32 3, %v158
    %v160 = vrot.slane %v143, %v159
    %v161 = vlaneseq
    %v162 = vshrl.u32 %v161, 7
    %v163 = vsub.s32 4, %v162
    %v164 = vrot.slane %v143, %v163
    %v165 = vlaneseq
    %v166 = vshrl.u32 %v165, 7
    %v167 = vsub.s32 5, %v166
    %v168 = vrot.slane %v143, %v167
    %v169 = vlaneseq
    %v170 = vshrl.u32 %v169, 7
    %v171 = vsub.s32 6, %v170
    %v172 = vrot.slane %v143, %v171
    %v173 = vlaneseq
    %v174 = vshrl.u32 %v173, 7
    %v175 = vsub.s32 7, %v174
    %v176 = vrot.slane %v143, %v175
    %v261 = vunpack.c.l.b16 %v67
    %v262 = vunpack.c.h.b16 %v67
    %v263 = vunpack.c.l.b16 %v68
    %v264 = vunpack.c.h.b16 %v68
    %v265 = vunpack.c.l.b16 %v69
    %v266 = vunpack.c.h.b16 %v69
    %v267 = vunpack.c.l.b16 %v70
    %v268 = vunpack.c.h.b16 %v70
    %v269 = vunpack.c.l.b16 %v71
    %v270 = vunpack.c.h.b16 %v71
    %v271 = vunpack.c.l.b16 %v72
    %v272 = vunpack.c.h.b16 %v72
    %v273 = vunpack.c.l.b16 %v73
    %v274 = vunpack.c.h.b16 %v73
    %v275 = vunpack.c.l.b16 %v74
    %v276 = vunpack.c.h.b16 %v74
    %v277 = vunpack.c.l.b16 %v75
    %v278 = vunpack.c.h.b16 %v75
    %v279 = vunpack.c.l.b16 %v76
    %v280 = vunpack.c.h.b16 %v76
    %v281 = vunpack.c.l.b16 %v77
    %v282 = vunpack.c.h.b16 %v77
    %v283 = vunpack.c.l.b16 %v78
    %v284 = vunpack.c.h.b16 %v78
    %v285 = vunpack.c.l.b16 %v79
    %v286 = vunpack.c.h.b16 %v79
    %v287 = vunpack.c.l.b16 %v80
    %v288 = vunpack.c.h.b16 %v80
    %v289 = vunpack.c.l.b16 %v81
    %v290 = vunpack.c.h.b16 %v81
    %v291 = vunpack.c.l.b16 %v82
    %v292 = vunpack.c.h.b16 %v82
    %v293 = vunpack.c.l.b16 %v83
    %v294 = vunpack.c.h.b16 %v83
    %v295 = vunpack.c.l.b16 %v84
    %v296 = vunpack.c.h.b16 %v84
    %v297 = vunpack.c.l.b16 %v85
    %v298 = vunpack.c.h.b16 %v85
    %v299 = vunpack.c.l.b16 %v86
    %v300 = vunpack.c.h.b16 %v86
    %v301 = vunpack.c.l.b16 %v87
    %v302 = vunpack.c.h.b16 %v87
    %v303 = vunpack.c.l.b16 %v88
    %v304 = vunpack.c.h.b16 %v88
    %v305 = vunpack.c.l.b16 %v89
    %v306 = vunpack.c.h.b16 %v89
    %v307 = vunpack.c.l.b16 %v90
    %v308 = vunpack.c.h.b16 %v90
    %v309 = vunpack.c.l.b16 %v91
    %v310 = vunpack.c.h.b16 %v91
    %v311 = vunpack.c.l.b16 %v92
    %v312 = vunpack.c.h.b16 %v92
    %v313 = vunpack.c.l.b16 %v93
    %v314 = vunpack.c.h.b16 %v93
    %v315 = vunpack.c.l.b16 %v94
    %v316 = vunpack.c.h.b16 %v94
    %v317 = vunpack.c.l.b16 %v95
    %v318 = vunpack.c.h.b16 %v95
    %v319 = vunpack.c.l.b16 %v96
    %v320 = vunpack.c.h.b16 %v96
    %v321 = vunpack.c.l.b16 %v97
    %v322 = vunpack.c.h.b16 %v97
    %v323 = vunpack.c.l.b16 %v98
    %v324 = vunpack.c.h.b16 %v98
    %v325 = vunpack.c.l.b16 %v99
    %v326 = vunpack.c.h.b16 %v99
    %v327 = vunpack.c.l.b16 %v100
    %v328 = vunpack.c.h.b16 %v100
    %v329 = vunpack.c.l.b16 %v101
    %v330 = vunpack.c.h.b16 %v101
    %v331 = vunpack.c.l.b16 %v102
    %v332 = vunpack.c.h.b16 %v102
    %v333 = vunpack.c.l.b16 %v103
    %v334 = vunpack.c.h.b16 %v103
    %v335 = vunpack.c.l.b16 %v104
    %v336 = vunpack.c.h.b16 %v104
    %v337 = vunpack.c.l.b16 %v105
    %v338 = vunpack.c.h.b16 %v105
    %v339 = vunpack.c.l.b16 %v106
    %v340 = vunpack.c.h.b16 %v106
    %v341 = vunpack.c.l.b16 %v107
    %v342 = vunpack.c.h.b16 %v107
    %v343 = vunpack.c.l.b16 %v108
    %v344 = vunpack.c.h.b16 %v108
    %v345 = vunpack.c.l.b16 %v109
    %v346 = vunpack.c.h.b16 %v109
    %v347 = vunpack.c.l.b16 %v110
    %v348 = vunpack.c.h.b16 %v110
    %v349 = vunpack.c.l.b16 %v111
    %v350 = vunpack.c.h.b16 %v111
    %v351 = vunpack.c.l.b16 %v112
    %v352 = vunpack.c.h.b16 %v112
    %v353 = vunpack.c.l.b16 %v113
    %v354 = vunpack.c.h.b16 %v113
    %v355 = vunpack.c.l.b16 %v114
    %v356 = vunpack.c.h.b16 %v114
    %v357 = vunpack.c.l.b16 %v115
    %v358 = vunpack.c.h.b16 %v115
    %v359 = vunpack.c.l.b16 %v116
    %v360 = vunpack.c.h.b16 %v116
    %v361 = vunpack.c.l.b16 %v117
    %v362 = vunpack.c.h.b16 %v117
    %v363 = vunpack.c.l.b16 %v118
    %v364 = vunpack.c.h.b16 %v118
    %v365 = vunpack.c.l.b16 %v119
    %v366 = vunpack.c.h.b16 %v119
    %v367 = vunpack.c.l.b16 %v120
    %v368 = vunpack.c.h.b16 %v120
    %v369 = vunpack.c.l.b16 %v121
    %v370 = vunpack.c.h.b16 %v121
    %v371 = vunpack.c.l.b16 %v122
    %v372 = vunpack.c.h.b16 %v122
    %v373 = vunpack.c.l.b16 %v123
    %v374 = vunpack.c.h.b16 %v123
    %v375 = vunpack.c.l.b16 %v124
    %v376 = vunpack.c.h.b16 %v124
    %v377 = vunpack.c.l.b16 %v125
    %v378 = vunpack.c.h.b16 %v125
    %v379 = vunpack.c.l.b16 %v126
    %v380 = vunpack.c.h.b16 %v126
    %v381 = vunpack.c.l.b16 %v127
    %v382 = vunpack.c.h.b16 %v127
    %v383 = vunpack.c.l.b16 %v128
    %v384 = vunpack.c.h.b16 %v128
    %v385 = vunpack.c.l.b16 %v129
    %v386 = vunpack.c.h.b16 %v129
    %v387 = vunpack.c.l.b16 %v130
    %v388 = vunpack.c.h.b16 %v130
    %v389 = vunpack.c.l.b16 %v131
    %v390 = vunpack.c.h.b16 %v131
    %v391 = vunpack.c.l.b16 %v132
    %v392 = vunpack.c.h.b16 %v132
    %v393 = vunpack.c.l.b16 %v133
    %v394 = vunpack.c.h.b16 %v133
    %v395 = vunpack.c.l.b16 %v134
    %v396 = vunpack.c.h.b16 %v134
    %v397 = vunpack.c.l.b16 %v135
    %v398 = vunpack.c.h.b16 %v135
    %v399 = vunpack.c.l.b16 %v136
    %v400 = vunpack.c.h.b16 %v136
    %v401 = vunpack.c.l.b16 %v137
    %v402 = vunpack.c.h.b16 %v137
    %v403 = vunpack.c.l.b16 %v138
    %v404 = vunpack.c.h.b16 %v138
    %v405 = vunpack.c.l.b16 %v139
    %v406 = vunpack.c.h.b16 %v139
    %v407 = vunpack.c.l.b16 %v140
    %v408 = vunpack.c.h.b16 %v140
    %v409 = vunpack.c.l.b16 %v141
    %v410 = vunpack.c.h.b16 %v141
    %v411 = vunpack.c.l.b16 %v142
    %v412 = vunpack.c.h.b16 %v142
    %v413 = vpack.c.b16 %v269, %v261
    %v414 = vpack.c.b16 %v270, %v262
    %v415 = vpack.c.b16 %v271, %v263
    %v416 = vpack.c.b16 %v272, %v264
    %v417 = vpack.c.b16 %v273, %v265
    %v418 = vpack.c.b16 %v274, %v266
    %v419 = vpack.c.b16 %v275, %v267
    %v420 = vpack.c.b16 %v276, %v268
    %v421 = vpack.c.b16 %v285, %v277
    %v422 = vpack.c.b16 %v286, %v278
    %v423 = vpack.c.b16 %v287, %v279
    %v424 = vpack.c.b16 %v288, %v280
    %v425 = vpack.c.b16 %v289, %v281
    %v426 = vpack.c.b16 %v290, %v282
    %v427 = vpack.c.b16 %v291, %v283
    %v428 = vpack.c.b16 %v292, %v284
    %v429 = vpack.c.b16 %v301, %v293
    %v430 = vpack.c.b16 %v302, %v294
    %v431 = vpack.c.b16 %v303, %v295
    %v432 = vpack.c.b16 %v304, %v296
    %v433 = vpack.c.b16 %v305, %v297
    %v434 = vpack.c.b16 %v306, %v298
    %v435 = vpack.c.b16 %v307, %v299
    %v436 = vpack.c.b16 %v308, %v300
    %v437 = vpack.c.b16 %v317, %v309
    %v438 = vpack.c.b16 %v318, %v310
    %v439 = vpack.c.b16 %v319, %v311
    %v440 = vpack.c.b16 %v320, %v312
    %v441 = vpack.c.b16 %v321, %v313
    %v442 = vpack.c.b16 %v322, %v314
    %v443 = vpack.c.b16 %v323, %v315
    %v444 = vpack.c.b16 %v324, %v316
    %v445 = vpack.c.b16 %v333, %v325
    %v446 = vpack.c.b16 %v334, %v326
    %v447 = vpack.c.b16 %v335, %v327
    %v448 = vpack.c.b16 %v336, %v328
    %v449 = vpack.c.b16 %v337, %v329
    %v450 = vpack.c.b16 %v338, %v330
    %v451 = vpack.c.b16 %v339, %v331
    %v452 = vpack.c.b16 %v340, %v332
    %v453 = vpack.c.b16 %v349, %v341
    %v454 = vpack.c.b16 %v350, %v342
    %v455 = vpack.c.b16 %v351, %v343
    %v456 = vpack.c.b16 %v352, %v344
    %v457 = vpack.c.b16 %v353, %v345
    %v458 = vpack.c.b16 %v354, %v346
    %v459 = vpack.c.b16 %v355, %v347
    %v460 = vpack.c.b16 %v356, %v348
    %v461 = vpack.c.b16 %v365, %v357
    %v462 = vpack.c.b16 %v366, %v358
    %v463 = vpack.c.b16 %v367, %v359
    %v464 = vpack.c.b16 %v368, %v360
    %v465 = vpack.c.b16 %v369, %v361
    %v466 = vpack.c.b16 %v370, %v362
    %v467 = vpack.c.b16 %v371, %v363
    %v468 = vpack.c.b16 %v372, %v364
    %v469 = vpack.c.b16 %v381, %v373
    %v470 = vpack.c.b16 %v382, %v374
    %v471 = vpack.c.b16 %v383, %v375
    %v472 = vpack.c.b16 %v384, %v376
    %v473 = vpack.c.b16 %v385, %v377
    %v474 = vpack.c.b16 %v386, %v378
    %v475 = vpack.c.b16 %v387, %v379
    %v476 = vpack.c.b16 %v388, %v380
    %v477 = vpack.c.b16 %v397, %v389
    %v478 = vpack.c.b16 %v398, %v390
    %v479 = vpack.c.b16 %v399, %v391
    %v480 = vpack.c.b16 %v400, %v392
    %v481 = vpack.c.b16 %v401, %v393
    %v482 = vpack.c.b16 %v402, %v394
    %v483 = vpack.c.b16 %v403, %v395
    %v484 = vpack.c.b16 %v404, %v396
    %v485 = vpack.c.b16 %v405, %v405
    %v486 = vpack.c.b16 %v406, %v406
    %v487 = vpack.c.b16 %v407, %v407
    %v488 = vpack.c.b16 %v408, %v408
    %v489 = vpack.c.b16 %v409, %v409
    %v490 = vpack.c.b16 %v410, %v410
    %v491 = vpack.c.b16 %v411, %v411
    %v492 = vpack.c.b16 %v412, %v412
    %vm565 = vcmask 154624
    %v567 = vsel %vm565, %v66, 0
    %vm569 = vcmask 1040384
    %vm570 = vcmask 1041408
    %v571 = vsel %vm569, 4294967295, 65535
    %v572 = vsel %vm570, %v571, 0
    %v574 = vand.u32 %v485, %v572
    %v577 = vand.u32 %v486, %v572
    %v580 = vand.u32 %v487, %v572
    %v583 = vand.u32 %v488, %v572
    %v586 = vand.u32 %v489, %v572
    %v589 = vand.u32 %v490, %v572
    %v592 = vand.u32 %v491, %v572
    %v595 = vand.u32 %v492, %v572
    %597 = vmatprep.subr.bf16.mxu0 %v414
    %598 = vmatpush1.bf16.msra.mxu0 %v413
    %599 = vmatprep.subr.bf16.mxu0 %v422
    %600 = vmatpush1.bf16.msra.mxu0 %v421
    %601 = vmatprep.subr.bf16.mxu0 %v430
    %602 = vmatpush1.bf16.msra.mxu0 %v429
    %603 = vmatprep.subr.bf16.mxu0 %v438
    %604 = vmatpush1.bf16.msra.mxu0 %v437
    %605 = vmatprep.subr.bf16.mxu0 %v446
    %606 = vmatpush1.bf16.msra.mxu0 %v445
    %607 = vmatprep.subr.bf16.mxu0 %v454
    %608 = vmatpush1.bf16.msra.mxu0 %v453
    %609 = vmatprep.subr.bf16.mxu0 %v462
    %610 = vmatpush1.bf16.msra.mxu0 %v461
    %611 = vmatprep.subr.bf16.mxu0 %v470
    %612 = vmatpush1.bf16.msra.mxu0 %v469
    %613 = vmatprep.subr.bf16.mxu0 %v478
    %614 = vmatpush1.bf16.msra.mxu0 %v477
    %615 = vmatprep.subr.bf16.mxu0 %v577
    %616 = vmatpush1.bf16.msra.mxu0 %v574
    %617 = vmatprep.subr.bf16.mxu0 0
    %618 = vmatpush1.bf16.msra.mxu0 0
    %619 = vmatprep.subr.bf16.mxu0 0
    %620 = vmatpush1.bf16.msra.mxu0 0
    %621 = vmatprep.subr.bf16.mxu0 0
    %622 = vmatpush1.bf16.msra.mxu0 0
    %623 = vmatprep.subr.bf16.mxu0 0
    %624 = vmatpush1.bf16.msra.mxu0 0
    %625 = vmatprep.subr.bf16.mxu0 0
    %626 = vmatpush1.bf16.msra.mxu0 0
    %627 = vmatprep.subr.bf16.mxu0 0
    %628 = vmatpush1.bf16.msra.mxu0 0
    %629 = vmatprep.mubr.bf16.mxu0 %v567
    %630 = vmatmul.mubr.bf16.gmra.mrb[0].mxu0 %v65
    %v631 = vpop.f32.mrb[0].mxu0
    %v632 = vadd.f32 %v148, %v631
    %v633 = vpop.f32.mrb[0].mxu0
    %v634 = vadd.f32 %v152, %v633
    %v635 = vpop.f32.mrb[0].mxu0
    %v636 = vpop.f32.mrb[0].mxu0
    %637 = vdwg.mxu0
    %638 = vmatprep.subr.bf16.mxu0 %v416
    %639 = vmatpush1.bf16.msra.mxu0 %v415
    %640 = vmatprep.subr.bf16.mxu0 %v424
    %641 = vmatpush1.bf16.msra.mxu0 %v423
    %642 = vmatprep.subr.bf16.mxu0 %v432
    %643 = vmatpush1.bf16.msra.mxu0 %v431
    %644 = vmatprep.subr.bf16.mxu0 %v440
    %645 = vmatpush1.bf16.msra.mxu0 %v439
    %646 = vmatprep.subr.bf16.mxu0 %v448
    %647 = vmatpush1.bf16.msra.mxu0 %v447
    %648 = vmatprep.subr.bf16.mxu0 %v456
    %649 = vmatpush1.bf16.msra.mxu0 %v455
    %650 = vmatprep.subr.bf16.mxu0 %v464
    %651 = vmatpush1.bf16.msra.mxu0 %v463
    %652 = vmatprep.subr.bf16.mxu0 %v472
    %653 = vmatpush1.bf16.msra.mxu0 %v471
    %654 = vmatprep.subr.bf16.mxu0 %v480
    %655 = vmatpush1.bf16.msra.mxu0 %v479
    %656 = vmatprep.subr.bf16.mxu0 %v583
    %657 = vmatpush1.bf16.msra.mxu0 %v580
    %658 = vmatprep.subr.bf16.mxu0 0
    %659 = vmatpush1.bf16.msra.mxu0 0
    %660 = vmatprep.subr.bf16.mxu0 0
    %661 = vmatpush1.bf16.msra.mxu0 0
    %662 = vmatprep.subr.bf16.mxu0 0
    %663 = vmatpush1.bf16.msra.mxu0 0
    %664 = vmatprep.subr.bf16.mxu0 0
    %665 = vmatpush1.bf16.msra.mxu0 0
    %666 = vmatprep.subr.bf16.mxu0 0
    %667 = vmatpush1.bf16.msra.mxu0 0
    %668 = vmatprep.subr.bf16.mxu0 0
    %669 = vmatpush1.bf16.msra.mxu0 0
    %670 = vmatprep.mubr.bf16.mxu0 %v567
    %671 = vmatmul.mubr.bf16.gmra.mrb[0].mxu0 %v65
    %v672 = vpop.f32.mrb[0].mxu0
    %v673 = vadd.f32 %v156, %v672
    %v674 = vpop.f32.mrb[0].mxu0
    %v675 = vadd.f32 %v160, %v674
    %v676 = vpop.f32.mrb[0].mxu0
    %v677 = vpop.f32.mrb[0].mxu0
    %678 = vdwg.mxu0
    %679 = vmatprep.subr.bf16.mxu0 %v418
    %680 = vmatpush1.bf16.msra.mxu0 %v417
    %681 = vmatprep.subr.bf16.mxu0 %v426
    %682 = vmatpush1.bf16.msra.mxu0 %v425
    %683 = vmatprep.subr.bf16.mxu0 %v434
    %684 = vmatpush1.bf16.msra.mxu0 %v433
    %685 = vmatprep.subr.bf16.mxu0 %v442
    %686 = vmatpush1.bf16.msra.mxu0 %v441
    %687 = vmatprep.subr.bf16.mxu0 %v450
    %688 = vmatpush1.bf16.msra.mxu0 %v449
    %689 = vmatprep.subr.bf16.mxu0 %v458
    %690 = vmatpush1.bf16.msra.mxu0 %v457
    %691 = vmatprep.subr.bf16.mxu0 %v466
    %692 = vmatpush1.bf16.msra.mxu0 %v465
    %693 = vmatprep.subr.bf16.mxu0 %v474
    %694 = vmatpush1.bf16.msra.mxu0 %v473
    %695 = vmatprep.subr.bf16.mxu0 %v482
    %696 = vmatpush1.bf16.msra.mxu0 %v481
    %697 = vmatprep.subr.bf16.mxu0 %v589
    %698 = vmatpush1.bf16.msra.mxu0 %v586
    %699 = vmatprep.subr.bf16.mxu0 0
    %700 = vmatpush1.bf16.msra.mxu0 0
    %701 = vmatprep.subr.bf16.mxu0 0
    %702 = vmatpush1.bf16.msra.mxu0 0
    %703 = vmatprep.subr.bf16.mxu0 0
    %704 = vmatpush1.bf16.msra.mxu0 0
    %705 = vmatprep.subr.bf16.mxu0 0
    %706 = vmatpush1.bf16.msra.mxu0 0
    %707 = vmatprep.subr.bf16.mxu0 0
    %708 = vmatpush1.bf16.msra.mxu0 0
    %709 = vmatprep.subr.bf16.mxu0 0
    %710 = vmatpush1.bf16.msra.mxu0 0
    %711 = vmatprep.mubr.bf16.mxu0 %v567
    %712 = vmatmul.mubr.bf16.gmra.mrb[0].mxu0 %v65
    %v713 = vpop.f32.mrb[0].mxu0
    %v714 = vadd.f32 %v164, %v713
    %v715 = vpop.f32.mrb[0].mxu0
    %v716 = vadd.f32 %v168, %v715
    %v717 = vpop.f32.mrb[0].mxu0
    %v718 = vpop.f32.mrb[0].mxu0
    %719 = vdwg.mxu0
    %720 = vmatprep.subr.bf16.mxu0 %v420
    %721 = vmatpush1.bf16.msra.mxu0 %v419
    %722 = vmatprep.subr.bf16.mxu0 %v428
    %723 = vmatpush1.bf16.msra.mxu0 %v427
    %724 = vmatprep.subr.bf16.mxu0 %v436
    %725 = vmatpush1.bf16.msra.mxu0 %v435
    %726 = vmatprep.subr.bf16.mxu0 %v444
    %727 = vmatpush1.bf16.msra.mxu0 %v443
    %728 = vmatprep.subr.bf16.mxu0 %v452
    %729 = vmatpush1.bf16.msra.mxu0 %v451
    %730 = vmatprep.subr.bf16.mxu0 %v460
    %731 = vmatpush1.bf16.msra.mxu0 %v459
    %732 = vmatprep.subr.bf16.mxu0 %v468
    %733 = vmatpush1.bf16.msra.mxu0 %v467
    %734 = vmatprep.subr.bf16.mxu0 %v476
    %735 = vmatpush1.bf16.msra.mxu0 %v475
    %736 = vmatprep.subr.bf16.mxu0 %v484
    %737 = vmatpush1.bf16.msra.mxu0 %v483
    %738 = vmatprep.subr.bf16.mxu0 %v595
    %739 = vmatpush1.bf16.msra.mxu0 %v592
    %740 = vmatprep.subr.bf16.mxu0 0
    %741 = vmatpush1.bf16.msra.mxu0 0
    %742 = vmatprep.subr.bf16.mxu0 0
    %743 = vmatpush1.bf16.msra.mxu0 0
    %744 = vmatprep.subr.bf16.mxu0 0
    %745 = vmatpush1.bf16.msra.mxu0 0
    %746 = vmatprep.subr.bf16.mxu0 0
    %747 = vmatpush1.bf16.msra.mxu0 0
    %748 = vmatprep.subr.bf16.mxu0 0
    %749 = vmatpush1.bf16.msra.mxu0 0
    %750 = vmatprep.subr.bf16.mxu0 0
    %751 = vmatpush1.bf16.msra.mxu0 0
    %752 = vmatprep.mubr.bf16.mxu0 %v567
    %753 = vmatmul.mubr.bf16.gmra.mrb[0].mxu0 %v65
    %v754 = vpop.f32.mrb[0].mxu0
    %v755 = vadd.f32 %v172, %v754
    %v756 = vpop.f32.mrb[0].mxu0
    %v757 = vadd.f32 %v176, %v756
    %v758 = vpop.f32.mrb[0].mxu0
    %v759 = vpop.f32.mrb[0].mxu0
    %760 = vdwg.mxu0
    %v761 = vmax.f32 %v632, 0.0
    %v762 = vmax.f32 %v634, 0.0
    %v763 = vmax.f32 %v673, 0.0
    %v764 = vmax.f32 %v675, 0.0
    %v765 = vmax.f32 %v714, 0.0
    %v766 = vmax.f32 %v716, 0.0
    %v767 = vmax.f32 %v755, 0.0
    %v768 = vmax.f32 %v757, 0.0
    %v769 = vpack.c.bf16 %v761, %v761
    %v770 = vpack.c.bf16 %v762, %v762
    %v771 = vpack.c.bf16 %v763, %v763
    %v772 = vpack.c.bf16 %v764, %v764
    %v773 = vpack.c.bf16 %v765, %v765
    %v774 = vpack.c.bf16 %v766, %v766
    %v775 = vpack.c.bf16 %v767, %v767
    %v776 = vpack.c.bf16 %v768, %v768
    %v777 = vmax.bf16 %v769, %v771
    %v778 = vmax.bf16 %v770, %v772
    %v779 = vmax.bf16 %v777, %v773
    %v780 = vmax.bf16 %v778, %v774
    %v781 = vmax.bf16 %v779, %v775
    %v782 = vmax.bf16 %v780, %v776
    %v783 = vld [vmem:[%s3] sm:$0xf]
    %v784 = vld [vmem:[%s3 + $0x4] sm:$0xf]
    %v785 = vld [vmem:[%s3 + $0x8] sm:$0xf]
    %v786 = vld [vmem:[%s3 + $0xc] sm:$0xf]
    %v787 = vld [vmem:[%s3 + $0x10] sm:$0xf]
    %v788 = vld [vmem:[%s3 + $0x14] sm:$0xf]
    %v789 = vld [vmem:[%s3 + $0x18] sm:$0xf]
    %v790 = vld [vmem:[%s3 + $0x1c] sm:$0xf]
    %v791 = vld [vmem:[%s3 + $0x20] sm:$0xf]
    %v792 = vld [vmem:[%s3 + $0x24] sm:$0xf]
    %v793 = vld [vmem:[%s3 + $0x28] sm:$0xf]
    %v794 = vld [vmem:[%s3 + $0x2c] sm:$0xf]
    %v795 = vld [vmem:[%s3 + $0x30] sm:$0xf]
    %v796 = vld [vmem:[%s3 + $0x34] sm:$0xf]
    %v797 = vld [vmem:[%s3 + $0x38] sm:$0xf]
    %v798 = vld [vmem:[%s3 + $0x3c] sm:$0xf]
    %v799 = vld [vmem:[%s3 + $0x40] sm:$0xf]
    %v800 = vld [vmem:[%s3 + $0x44] sm:$0xf]
    %v801 = vld [vmem:[%s3 + $0x48] sm:$0xf]
    %v802 = vld [vmem:[%s3 + $0x4c] sm:$0xf]
    %v803 = vld [vmem:[%s3 + $0x50] sm:$0xf]
    %v804 = vld [vmem:[%s3 + $0x54] sm:$0xf]
    %v805 = vld [vmem:[%s3 + $0x58] sm:$0xf]
    %v806 = vld [vmem:[%s3 + $0x5c] sm:$0xf]
    %v807 = vld [vmem:[%s3 + $0x60] sm:$0xf]
    %v808 = vld [vmem:[%s3 + $0x64] sm:$0xf]
    %v809 = vld [vmem:[%s3 + $0x68] sm:$0xf]
    %v810 = vld [vmem:[%s3 + $0x6c] sm:$0xf]
    %v811 = vld [vmem:[%s3 + $0x70] sm:$0xf]
    %v812 = vld [vmem:[%s3 + $0x74] sm:$0xf]
    %v813 = vld [vmem:[%s3 + $0x78] sm:$0xf]
    %v814 = vld [vmem:[%s3 + $0x7c] sm:$0xf]
    %v815 = vld [vmem:[%s4] sm:$0x1]
    %v817 = vlaneseq
    %v818 = vshrl.u32 %v817, 7
    %v819 = vsub.s32 0, %v818
    %v820 = vrot.slane %v815, %v819
    %v854 = vunpack.c.l.b16 %v783
    %v855 = vunpack.c.l.b16 %v784
    %v856 = vunpack.c.l.b16 %v785
    %v857 = vunpack.c.l.b16 %v786
    %v858 = vunpack.c.l.b16 %v787
    %v859 = vunpack.c.l.b16 %v788
    %v860 = vunpack.c.l.b16 %v789
    %v861 = vunpack.c.l.b16 %v790
    %v862 = vunpack.c.l.b16 %v791
    %v863 = vunpack.c.l.b16 %v792
    %v864 = vunpack.c.l.b16 %v793
    %v865 = vunpack.c.l.b16 %v794
    %v866 = vunpack.c.l.b16 %v795
    %v867 = vunpack.c.l.b16 %v796
    %v868 = vunpack.c.l.b16 %v797
    %v869 = vunpack.c.l.b16 %v798
    %v870 = vunpack.c.l.b16 %v799
    %v871 = vunpack.c.l.b16 %v800
    %v872 = vunpack.c.l.b16 %v801
    %v873 = vunpack.c.l.b16 %v802
    %v874 = vunpack.c.l.b16 %v803
    %v875 = vunpack.c.l.b16 %v804
    %v876 = vunpack.c.l.b16 %v805
    %v877 = vunpack.c.l.b16 %v806
    %v878 = vunpack.c.l.b16 %v807
    %v879 = vunpack.c.l.b16 %v808
    %v880 = vunpack.c.l.b16 %v809
    %v881 = vunpack.c.l.b16 %v810
    %v882 = vunpack.c.l.b16 %v811
    %v883 = vunpack.c.l.b16 %v812
    %v884 = vunpack.c.l.b16 %v813
    %v885 = vunpack.c.l.b16 %v814
    %v886 = vpack.c.b16 %v855, %v854
    %v887 = vpack.c.b16 %v857, %v856
    %v888 = vpack.c.b16 %v859, %v858
    %v889 = vpack.c.b16 %v861, %v860
    %v890 = vpack.c.b16 %v863, %v862
    %v891 = vpack.c.b16 %v865, %v864
    %v892 = vpack.c.b16 %v867, %v866
    %v893 = vpack.c.b16 %v869, %v868
    %v894 = vpack.c.b16 %v871, %v870
    %v895 = vpack.c.b16 %v873, %v872
    %v896 = vpack.c.b16 %v875, %v874
    %v897 = vpack.c.b16 %v877, %v876
    %v898 = vpack.c.b16 %v879, %v878
    %v899 = vpack.c.b16 %v881, %v880
    %v900 = vpack.c.b16 %v883, %v882
    %v901 = vpack.c.b16 %v885, %v884
    %918 = vmatprep.subr.bf16.mxu0 0
    %919 = vmatpush1.bf16.msra.mxu0 %v886
    %920 = vmatprep.subr.bf16.mxu0 0
    %921 = vmatpush1.bf16.msra.mxu0 %v887
    %922 = vmatprep.subr.bf16.mxu0 0
    %923 = vmatpush1.bf16.msra.mxu0 %v888
    %924 = vmatprep.subr.bf16.mxu0 0
    %925 = vmatpush1.bf16.msra.mxu0 %v889
    %926 = vmatprep.subr.bf16.mxu0 0
    %927 = vmatpush1.bf16.msra.mxu0 %v890
    %928 = vmatprep.subr.bf16.mxu0 0
    %929 = vmatpush1.bf16.msra.mxu0 %v891
    %930 = vmatprep.subr.bf16.mxu0 0
    %931 = vmatpush1.bf16.msra.mxu0 %v892
    %932 = vmatprep.subr.bf16.mxu0 0
    %933 = vmatpush1.bf16.msra.mxu0 %v893
    %934 = vmatprep.subr.bf16.mxu0 0
    %935 = vmatpush1.bf16.msra.mxu0 %v894
    %936 = vmatprep.subr.bf16.mxu0 0
    %937 = vmatpush1.bf16.msra.mxu0 %v895
    %938 = vmatprep.subr.bf16.mxu0 0
    %939 = vmatpush1.bf16.msra.mxu0 %v896
    %940 = vmatprep.subr.bf16.mxu0 0
    %941 = vmatpush1.bf16.msra.mxu0 %v897
    %942 = vmatprep.subr.bf16.mxu0 0
    %943 = vmatpush1.bf16.msra.mxu0 %v898
    %944 = vmatprep.subr.bf16.mxu0 0
    %945 = vmatpush1.bf16.msra.mxu0 %v899
    %946 = vmatprep.subr.bf16.mxu0 0
    %947 = vmatpush1.bf16.msra.mxu0 %v900
    %948 = vmatprep.subr.bf16.mxu0 0
    %949 = vmatpush1.bf16.msra.mxu0 %v901
    %950 = vmatprep.mubr.bf16.mxu0 %v782
    %951 = vmatmul.mubr.bf16.gmra.mrb[0].mxu0 %v781
    %v952 = vpop.f32.mrb[0].mxu0
    %v953 = vadd.f32 %v820, %v952
    %v954 = vpop.f32.mrb[0].mxu0
    %v955 = vpop.f32.mrb[0].mxu0
    %v956 = vpop.f32.mrb[0].mxu0
    %957 = vdwg.mxu0
    %v958 = vmax.f32 %v953, 0.0
    %v959 = vpack.c.bf16 %v958, %v958
    %v960 = vld [vmem:[%s5] sm:$0xf]
    %v961 = vld [vmem:[%s5 + $0x4] sm:$0xf]
    %v962 = vld [vmem:[%s5 + $0x8] sm:$0xf]
    %v963 = vld [vmem:[%s5 + $0xc] sm:$0xf]
    %v964 = vld [vmem:[%s5 + $0x10] sm:$0xf]
    %v965 = vld [vmem:[%s5 + $0x14] sm:$0xf]
    %v966 = vld [vmem:[%s5 + $0x18] sm:$0xf]
    %v967 = vld [vmem:[%s5 + $0x1c] sm:$0xf]
    %v968 = vld [vmem:[%s5 + $0x20] sm:$0xf]
    %v969 = vld [vmem:[%s5 + $0x24] sm:$0xf]
    %v970 = vld [vmem:[%s5 + $0x28] sm:$0xf]
    %v971 = vld [vmem:[%s5 + $0x2c] sm:$0xf]
    %v972 = vld [vmem:[%s5 + $0x30] sm:$0xf]
    %v973 = vld [vmem:[%s5 + $0x34] sm:$0xf]
    %v974 = vld [vmem:[%s5 + $0x38] sm:$0xf]
    %v975 = vld [vmem:[%s5 + $0x3c] sm:$0xf]
    %v976 = vld [vmem:[%s6] sm:$0x1]
    %v978 = vlaneseq
    %v979 = vshrl.u32 %v978, 7
    %v980 = vsub.s32 0, %v979
    %v981 = vrot.slane %v976, %v980
    %v999 = vunpack.c.l.b16 %v960
    %v1000 = vunpack.c.l.b16 %v961
    %v1001 = vunpack.c.l.b16 %v962
    %v1002 = vunpack.c.l.b16 %v963
    %v1003 = vunpack.c.l.b16 %v964
    %v1004 = vunpack.c.l.b16 %v965
    %v1005 = vunpack.c.l.b16 %v966
    %v1006 = vunpack.c.l.b16 %v967
    %v1007 = vunpack.c.l.b16 %v968
    %v1008 = vunpack.c.l.b16 %v969
    %v1009 = vunpack.c.l.b16 %v970
    %v1010 = vunpack.c.l.b16 %v971
    %v1011 = vunpack.c.l.b16 %v972
    %v1012 = vunpack.c.l.b16 %v973
    %v1013 = vunpack.c.l.b16 %v974
    %v1014 = vunpack.c.l.b16 %v975
    %v1015 = vpack.c.b16 %v1000, %v999
    %v1016 = vpack.c.b16 %v1002, %v1001
    %v1017 = vpack.c.b16 %v1004, %v1003
    %v1018 = vpack.c.b16 %v1006, %v1005
    %v1019 = vpack.c.b16 %v1008, %v1007
    %v1020 = vpack.c.b16 %v1010, %v1009
    %v1021 = vpack.c.b16 %v1012, %v1011
    %v1022 = vpack.c.b16 %v1014, %v1013
    %1031 = vmatprep.subr.bf16.mxu0 0
    %1032 = vmatpush1.bf16.msra.mxu0 %v1015
    %1033 = vmatprep.subr.bf16.mxu0 0
    %1034 = vmatpush1.bf16.msra.mxu0 %v1016
    %1035 = vmatprep.subr.bf16.mxu0 0
    %1036 = vmatpush1.bf16.msra.mxu0 %v1017
    %1037 = vmatprep.subr.bf16.mxu0 0
    %1038 = vmatpush1.bf16.msra.mxu0 %v1018
    %1039 = vmatprep.subr.bf16.mxu0 0
    %1040 = vmatpush1.bf16.msra.mxu0 %v1019
    %1041 = vmatprep.subr.bf16.mxu0 0
    %1042 = vmatpush1.bf16.msra.mxu0 %v1020
    %1043 = vmatprep.subr.bf16.mxu0 0
    %1044 = vmatpush1.bf16.msra.mxu0 %v1021
    %1045 = vmatprep.subr.bf16.mxu0 0
    %1046 = vmatpush1.bf16.msra.mxu0 %v1022
    %1047 = vmatprep.subr.bf16.mxu0 0
    %1048 = vmatpush1.bf16.msra.mxu0 0
    %1049 = vmatprep.subr.bf16.mxu0 0
    %1050 = vmatpush1.bf16.msra.mxu0 0
    %1051 = vmatprep.subr.bf16.mxu0 0
    %1052 = vmatpush1.bf16.msra.mxu0 0
    %1053 = vmatprep.subr.bf16.mxu0 0
    %1054 = vmatpush1.bf16.msra.mxu0 0
    %1055 = vmatprep.subr.bf16.mxu0 0
    %1056 = vmatpush1.bf16.msra.mxu0 0
    %1057 = vmatprep.subr.bf16.mxu0 0
    %1058 = vmatpush1.bf16.msra.mxu0 0
    %1059 = vmatprep.subr.bf16.mxu0 0
    %1060 = vmatpush1.bf16.msra.mxu0 0
    %1061 = vmatprep.subr.bf16.mxu0 0
    %1062 = vmatpush1.bf16.msra.mxu0 0
    %1063 = vmatprep.mubr.bf16.mxu0 0
    %1064 = vmatmul.mubr.bf16.gmra.mrb[0].mxu0 %v959
    %v1065 = vpop.f32.mrb[0].mxu0
    %v1066 = vadd.f32 %v981, %v1065
    %v1067 = vpop.f32.mrb[0].mxu0
    %v1068 = vpop.f32.mrb[0].mxu0
    %v1069 = vpop.f32.mrb[0].mxu0
    %1070 = vdwg.mxu0
    %v1071 = vmax.f32 %v1066, 0.0
    %v1072 = vld [vmem:[%s7] sm:$0xff]
    %v1073 = vld [vmem:[%s7 + $0x8] sm:$0xff]
    %v1074 = vld [vmem:[%s7 + $0x10] sm:$0xff]
    %v1075 = vld [vmem:[%s7 + $0x18] sm:$0xff]
    %v1076 = vld [vmem:[%s7 + $0x20] sm:$0xff]
    %v1077 = vld [vmem:[%s7 + $0x28] sm:$0xff]
    %v1078 = vld [vmem:[%s7 + $0x30] sm:$0xff]
    %v1079 = vld [vmem:[%s7 + $0x38] sm:$0xff]
    %v1080 = vld [vmem:[%s8] sm:$0x1]
    %v1082 = vlaneseq
    %v1083 = vshrl.u32 %v1082, 7
    %v1084 = vsub.s32 0, %v1083
    %v1085 = vrot.slane %v1080, %v1084
    %vm1087 = vcmask 523264
    %v1089 = vsel %vm1087, %v1071, 0
    %1091 = vmatprep.subr.mxu0 0.0
    %1092 = vmatpush1.msra.mxu0 %v1072
    %1093 = vmatprep.subr.mxu0 0.0
    %1094 = vmatpush1.msra.mxu0 %v1073
    %1095 = vmatprep.subr.mxu0 0.0
    %1096 = vmatpush1.msra.mxu0 %v1074
    %1097 = vmatprep.subr.mxu0 0.0
    %1098 = vmatpush1.msra.mxu0 %v1075
    %1099 = vmatprep.subr.mxu0 0.0
    %1100 = vmatpush1.msra.mxu0 %v1076
    %1101 = vmatprep.subr.mxu0 0.0
    %1102 = vmatpush1.msra.mxu0 %v1077
    %1103 = vmatprep.subr.mxu0 0.0
    %1104 = vmatpush1.msra.mxu0 %v1078
    %1105 = vmatprep.subr.mxu0 0.0
    %1106 = vmatpush1.msra.mxu0 %v1079
    %1107 = vmatprep.subr.mxu0 0.0
    %1108 = vmatpush1.msra.mxu0 0.0
    %1109 = vmatprep.subr.mxu0 0.0
    %1110 = vmatpush1.msra.mxu0 0.0
    %1111 = vmatprep.subr.mxu0 0.0
    %1112 = vmatpush1.msra.mxu0 0.0
    %1113 = vmatprep.subr.mxu0 0.0
    %1114 = vmatpush1.msra.mxu0 0.0
    %1115 = vmatprep.subr.mxu0 0.0
    %1116 = vmatpush1.msra.mxu0 0.0
    %1117 = vmatprep.subr.mxu0 0.0
    %1118 = vmatpush1.msra.mxu0 0.0
    %1119 = vmatprep.subr.mxu0 0.0
    %1120 = vmatpush1.msra.mxu0 0.0
    %1121 = vmatprep.subr.mxu0 0.0
    %1122 = vmatpush1.msra.mxu0 0.0
    %1123 = vmatprep.subr.mxu0 0.0
    %1124 = vmatpush1.msra.mxu0 0.0
    %1125 = vmatprep.subr.mxu0 0.0
    %1126 = vmatpush1.msra.mxu0 0.0
    %1127 = vmatprep.subr.mxu0 0.0
    %1128 = vmatpush1.msra.mxu0 0.0
    %1129 = vmatprep.subr.mxu0 0.0
    %1130 = vmatpush1.msra.mxu0 0.0
    %1131 = vmatprep.subr.mxu0 0.0
    %1132 = vmatpush1.msra.mxu0 0.0
    %1133 = vmatprep.subr.mxu0 0.0
    %1134 = vmatpush1.msra.mxu0 0.0
    %1135 = vmatprep.subr.mxu0 0.0
    %1136 = vmatpush1.msra.mxu0 0.0
    %1137 = vmatprep.subr.mxu0 0.0
    %1138 = vmatpush1.msra.mxu0 0.0
    %1139 = vmatprep.subr.mxu0 0.0
    %1140 = vmatpush1.msra.mxu0 0.0
    %1141 = vmatprep.subr.mxu0 0.0
    %1142 = vmatpush1.msra.mxu0 0.0
    %1143 = vmatprep.subr.mxu0 0.0
    %1144 = vmatpush1.msra.mxu0 0.0
    %1145 = vmatprep.subr.mxu0 0.0
    %1146 = vmatpush1.msra.mxu0 0.0
    %1147 = vmatprep.subr.mxu0 0.0
    %1148 = vmatpush1.msra.mxu0 0.0
    %1149 = vmatprep.subr.mxu0 0.0
    %1150 = vmatpush1.msra.mxu0 0.0
    %1151 = vmatprep.subr.mxu0 0.0
    %1152 = vmatpush1.msra.mxu0 0.0
    %1153 = vmatprep.subr.mxu0 0.0
    %1154 = vmatpush1.msra.mxu0 0.0
    %1155 = vmatprep.mubr.f32.mxu0 0.0
    %1156 = vmatmul.mubr.f32.gmra.mrb[0].mxu0 %v1089
    %v1157 = vpop.f32.mrb[0].mxu0
    %v1158 = vadd.f32 %v1085, %v1157
    %v1159 = vpop.f32.mrb[0].mxu0
    %1160 = vdwg.mxu0
    %v1161 = vtanh.pop %v1158
    %v1162 = vld [vmem:[%s9] sm:$0xff]
    %v1163 = vld [vmem:[%s9 + $0x8] sm:$0xff]
    %v1164 = vld [vmem:[%s9 + $0x10] sm:$0xff]
    %v1165 = vld [vmem:[%s9 + $0x18] sm:$0xff]
    %v1166 = vld [vmem:[%s9 + $0x20] sm:$0xff]
    %v1167 = vld [vmem:[%s9 + $0x28] sm:$0xff]
    %v1168 = vld [vmem:[%s9 + $0x30] sm:$0xff]
    %v1169 = vld [vmem:[%s9 + $0x38] sm:$0xff]
    %v1170 = vld [vmem:[%s9 + $0x40] sm:$0xff]
    %v1171 = vld [vmem:[%s9 + $0x48] sm:$0xff]
    %v1172 = vld [vmem:[%s9 + $0x50] sm:$0xff]
    %v1173 = vld [vmem:[%s9 + $0x58] sm:$0xff]
    %v1174 = vld [vmem:[%s9 + $0x60] sm:$0xff]
    %v1175 = vld [vmem:[%s9 + $0x68] sm:$0xff]
    %v1176 = vld [vmem:[%s9 + $0x70] sm:$0xff]
    %v1177 = vld [vmem:[%s9 + $0x78] sm:$0xff]
    %v1178 = vld [vmem:[%s10] sm:$0x1]
    %v1180 = vlaneseq
    %v1181 = vshrl.u32 %v1180, 7
    %v1182 = vsub.s32 0, %v1181
    %v1183 = vrot.slane %v1178, %v1182
    %1185 = vmatprep.subr.mxu0 0.0
    %1186 = vmatpush1.msra.mxu0 %v1162
    %1187 = vmatprep.subr.mxu0 0.0
    %1188 = vmatpush1.msra.mxu0 %v1163
    %1189 = vmatprep.subr.mxu0 0.0
    %1190 = vmatpush1.msra.mxu0 %v1164
    %1191 = vmatprep.subr.mxu0 0.0
    %1192 = vmatpush1.msra.mxu0 %v1165
    %1193 = vmatprep.subr.mxu0 0.0
    %1194 = vmatpush1.msra.mxu0 %v1166
    %1195 = vmatprep.subr.mxu0 0.0
    %1196 = vmatpush1.msra.mxu0 %v1167
    %1197 = vmatprep.subr.mxu0 0.0
    %1198 = vmatpush1.msra.mxu0 %v1168
    %1199 = vmatprep.subr.mxu0 0.0
    %1200 = vmatpush1.msra.mxu0 %v1169
    %1201 = vmatprep.subr.mxu0 0.0
    %1202 = vmatpush1.msra.mxu0 %v1170
    %1203 = vmatprep.subr.mxu0 0.0
    %1204 = vmatpush1.msra.mxu0 %v1171
    %1205 = vmatprep.subr.mxu0 0.0
    %1206 = vmatpush1.msra.mxu0 %v1172
    %1207 = vmatprep.subr.mxu0 0.0
    %1208 = vmatpush1.msra.mxu0 %v1173
    %1209 = vmatprep.subr.mxu0 0.0
    %1210 = vmatpush1.msra.mxu0 %v1174
    %1211 = vmatprep.subr.mxu0 0.0
    %1212 = vmatpush1.msra.mxu0 %v1175
    %1213 = vmatprep.subr.mxu0 0.0
    %1214 = vmatpush1.msra.mxu0 %v1176
    %1215 = vmatprep.subr.mxu0 0.0
    %1216 = vmatpush1.msra.mxu0 %v1177
    %1217 = vmatprep.subr.mxu0 0.0
    %1218 = vmatpush1.msra.mxu0 0.0
    %1219 = vmatprep.subr.mxu0 0.0
    %1220 = vmatpush1.msra.mxu0 0.0
    %1221 = vmatprep.subr.mxu0 0.0
    %1222 = vmatpush1.msra.mxu0 0.0
    %1223 = vmatprep.subr.mxu0 0.0
    %1224 = vmatpush1.msra.mxu0 0.0
    %1225 = vmatprep.subr.mxu0 0.0
    %1226 = vmatpush1.msra.mxu0 0.0
    %1227 = vmatprep.subr.mxu0 0.0
    %1228 = vmatpush1.msra.mxu0 0.0
    %1229 = vmatprep.subr.mxu0 0.0
    %1230 = vmatpush1.msra.mxu0 0.0
    %1231 = vmatprep.subr.mxu0 0.0
    %1232 = vmatpush1.msra.mxu0 0.0
    %1233 = vmatprep.subr.mxu0 0.0
    %1234 = vmatpush1.msra.mxu0 0.0
    %1235 = vmatprep.subr.mxu0 0.0
    %1236 = vmatpush1.msra.mxu0 0.0
    %1237 = vmatprep.subr.mxu0 0.0
    %1238 = vmatpush1.msra.mxu0 0.0
    %1239 = vmatprep.subr.mxu0 0.0
    %1240 = vmatpush1.msra.mxu0 0.0
    %1241 = vmatprep.subr.mxu0 0.0
    %1242 = vmatpush1.msra.mxu0 0.0
    %1243 = vmatprep.subr.mxu0 0.0
    %1244 = vmatpush1.msra.mxu0 0.0
    %1245 = vmatprep.subr.mxu0 0.0
    %1246 = vmatpush1.msra.mxu0 0.0
    %1247 = vmatprep.subr.mxu0 0.0
    %1248 = vmatpush1.msra.mxu0 0.0
    %1249 = vmatprep.mubr.f32.mxu0 0.0
    %1250 = vmatmul.mubr.f32.gmra.mrb[0].mxu0 %v1161
    %v1251 = vpop.f32.mrb[0].mxu0
    %v1252 = vadd.f32 %v1183, %v1251
    %v1253 = vpop.f32.mrb[0].mxu0
    %1254 = vdwg.mxu0
    %v1255 = vlaneseq
    %v1256 = vand.u32 %v1255, 127
    %vm1257 = vcmp.lt.s32.totalorder %v1256, 7
    %v1258 = vsel %vm1257, %v1252, -inf
    %v1259 = vsel %vm570, %v1258, -inf
    %1260 = vmax.xlane.f32.xlu0 %v1259
    %v1261 = vpop.xlane.xlu0 %1260
    %v1262 = vsub.f32 %v1258, %v1261
    %v1263 = vmul.f32 %v1262, 1.442695
    %v1264 = vpow.pop %v1263
    %v1265 = vsel %vm570, %v1264, 0.0
    %1266 = vadd.xlane.f32.xlu0 %v1265
    %v1267 = vpop.xlane.xlu0 %1266
    %v1268 = vlog2.pop %v1267
    %v1269 = vmul.f32 %v1268, 0.6931472
    %v1270 = vsub.f32 %v1262, %v1269
    %v1271 = vsel %vm1257, %v1270, %v1252
    %1272 = vst [vmem:[%s11] sm:$0x3] %v1271
    // Predicated region
    $region50: #{acmodel_forward.1} parent=1 // pred_check
      _
    $region51: #{acmodel_forward.1} parent=1 // pred_check_branch
      %1274 = sbr.rel (0) target = $region53
    $region52: #{acmodel_forward.1} parent=1 // pred_region
      _
    $region53: #{acmodel_forward.1} parent=1 // pred_fallthru
      _
    // Predicated region
    $region54: #{acmodel_forward.1} parent=1 // pred_check
      _
    $region55: #{acmodel_forward.1} parent=1 // pred_check_branch
      %1276 = sbr.rel (0) target = $region57
    $region56: #{acmodel_forward.1} parent=1 // pred_region
      _
    $region57: #{acmodel_forward.1} parent=1 // pred_fallthru
      _
    %1277 = vsyncpa [#allocation3], 1

</llo_original>
